<compile_context>
chip_gen: v7x
topology: tpu7x:2x2x1
jax: 0.10.0
libtpu: 0.0.40
codegen_flags: <defaults>
</compile_context>

<pallas_src>
import jax
import jax.numpy as jnp
from jax.experimental import pallas as pl
from jax.experimental.pallas import tpu as pltpu


# ----------------------------- Pallas kernel --------------------------------
def manager_kernel(s_ref, w0_ref, b0_ref, w1_ref, b1_ref, w2_ref, b2_ref,
                   logp_ref, probs_ref):
    """Feature-major MLP (2 -> H -> H -> K) + log-softmax + probs.

    Shapes (all VMEM-resident, batch on the lane axis):
      s_ref  : (IN, TB)      w0_ref : (H, IN)   b0_ref : (H, 1)
      w1_ref : (H, H)        b1_ref : (H, 1)
      w2_ref : (K, H)        b2_ref : (K, 1)
      logp_ref / probs_ref : (K, TB)
    """
    x = s_ref[...].astype(jnp.float32)            # (IN, TB)
    w0 = w0_ref[...]                              # (H, IN), IN == 2

    # layer 0: Linear(2, H) + ReLU.  Contraction dim is 2 -> two full-lane
    # VPU FMAs.  x rows broadcast along sublanes (cheap); w0 columns are tiny
    # (H, 1) lane splats.
    h = (w0[:, 0:1] * x[0:1, :]
         + w0[:, 1:2] * x[1:2, :]
         + b0_ref[...])
    h = jnp.maximum(h, 0.0)                       # (H, TB)

    # layer 1: Linear(H, H) + ReLU   (dropout is identity in eval mode)
    # MXU matmul with N = TB (lane-dense).
    h = jnp.dot(w1_ref[...], h, preferred_element_type=jnp.float32) + b1_ref[...]
    h = jnp.maximum(h, 0.0)

    # output layer: Linear(H, K) -> raw logits, (K, TB)
    logits = jnp.dot(w2_ref[...], h, preferred_element_type=jnp.float32) + b2_ref[...]

    # Categorical(logits=...) normalization over the skill axis (8 sublanes).
    m = jnp.max(logits, axis=0, keepdims=True)          # (1, TB)
    z = logits - m
    logp = z - jnp.log(jnp.sum(jnp.exp(z), axis=0, keepdims=True))
    logp_ref[...] = logp
    probs_ref[...] = jnp.exp(logp)                # EUP; same writeback pipeline


# ------------------------------- wrapper -------------------------------------
def _round_up(x, m):
    return ((x + m - 1) // m) * m


def _cost_estimate(B, IN, H, K):
    flops = 2 * B * (IN * H + H * H + H * K) + 6 * B * K
    transcendentals = 2 * B * K + B               # exp(z), exp(logp), log(sum)
    weight_bytes = 4 * (H * IN + H + H * H + H + K * H + K)
    bytes_accessed = 4 * B * (IN + 2 * K) + weight_bytes
    return pl.CostEstimate(flops=flops, transcendentals=transcendentals,
                           bytes_accessed=bytes_accessed)


def manager_forward(s, params, *, batch_tile=4096, tiled_threshold=256):
    """Returns (normalized_log_probs, probs) of the Categorical, each (B, K).

    Params are feature-major (PyTorch nn.Linear orientation):
      w: (out_features, in_features), b: (out_features, 1).
    """
    w0, b0, w1, b1, w2, b2 = params
    B, IN = s.shape
    H = w0.shape[0]
    K = w2.shape[0]

    sT = s.T.astype(jnp.float32)                  # (IN, B), batch on lanes
    out_shape = (jax.ShapeDtypeStruct((K, B), jnp.float32),
                 jax.ShapeDtypeStruct((K, B), jnp.float32))
    cost = _cost_estimate(B, IN, H, K)

    if B < tiled_threshold:
        # Single shot, no grid: no pipeline prologue/epilogue, no
        # double-buffering; all (tiny) operands live whole in VMEM.
        vmem = pl.BlockSpec(memory_space=pltpu.MemorySpace.VMEM)
        logpT, probsT = pl.pallas_call(
            manager_kernel,
            out_shape=out_shape,
            in_specs=[vmem] * 7,
            out_specs=(vmem, vmem),
            cost_estimate=cost,
        )(sT, w0, b0, w1, b1, w2, b2)
    else:
        # Batch-tiled path: pipeline over the lane (batch) axis; weights stay
        # resident (same block every step).  TB ~= cdiv(B, 2) rounded to 128
        # (capped) guarantees >= 2 grid steps so v7x's two TensorCores both
        # get work; "parallel" lets megacore shard the axis.
        TB = min(batch_tile, max(128, _round_up(pl.cdiv(B, 2), 128)))
        grid = (pl.cdiv(B, TB),)

        def resident(arr):
            nd = arr.ndim
            return pl.BlockSpec(arr.shape, lambda i, _nd=nd: (0,) * _nd)

        logpT, probsT = pl.pallas_call(
            manager_kernel,
            out_shape=out_shape,
            grid=grid,
            in_specs=[
                pl.BlockSpec((IN, TB), lambda i: (0, i)),
                resident(w0), resident(b0),
                resident(w1), resident(b1),
                resident(w2), resident(b2),
            ],
            out_specs=(pl.BlockSpec((K, TB), lambda i: (0, i)),
                       pl.BlockSpec((K, TB), lambda i: (0, i))),
            compiler_params=pltpu.CompilerParams(
                dimension_semantics=("parallel",)),
            cost_estimate=cost,
        )(sT, w0, b0, w1, b1, w2, b2)

    # One cheap transpose per output back to (B, K) for the module contract.
    return logpT.T, probsT.T


# -------------------------- deterministic params ------------------------------
def init_params(key, in_dim, hidden_dim, n_skills):
    """nn.Linear-style init, stored feature-major: w (out, in), b (out, 1)."""
    ks = jax.random.split(key, 6)

    def linear(kw, kb, fan_in, fan_out):
        bound = 1.0 / jnp.sqrt(jnp.float32(fan_in))
        w = jax.random.uniform(kw, (fan_out, fan_in), jnp.float32, -bound, bound)
        b = jax.random.uniform(kb, (fan_out, 1), jnp.float32, -bound, bound)
        return w, b

    w0, b0 = linear(ks[0], ks[1], in_dim, hidden_dim)
    w1, b1 = linear(ks[2], ks[3], hidden_dim, hidden_dim)
    w2, b2 = linear(ks[4], ks[5], hidden_dim, n_skills)
    return (w0, b0, w1, b1, w2, b2)


def _reference(s, params):
    w0, b0, w1, b1, w2, b2 = params
    h = jnp.maximum(s @ w0.T + b0.T, 0.0)
    h = jnp.maximum(h @ w1.T + b1.T, 0.0)
    logits = h @ w2.T + b2.T
    return jax.nn.log_softmax(logits, axis=-1), jax.nn.softmax(logits, axis=-1)


# --------------------------------- main ---------------------------------------
if __name__ == "__main__":
    # DefaultManager-style small config
    IN_DIM = 2        # Net(2, ...)
    HIDDEN = 32       # config.hidden_dim
    N_SKILLS = 8      # config.n_skills

    key = jax.random.PRNGKey(0)
    k_params, k_s_small, k_s_big = jax.random.split(key, 3)
    params = init_params(k_params, IN_DIM, HIDDEN, N_SKILLS)

    # --- small batch: gridless single-shot path --------------------------------
    s_small = jax.random.normal(k_s_small, (8, IN_DIM), jnp.float32)
    logp, probs = manager_forward(s_small, params)
    jax.block_until_ready((logp, probs))

    ref_logp, ref_probs = _reference(s_small, params)
    assert logp.shape == (8, N_SKILLS) and probs.shape == (8, N_SKILLS)
    assert jnp.allclose(logp, ref_logp, atol=1e-5), "log-prob mismatch (small)"
    assert jnp.allclose(probs, ref_probs, atol=1e-5), "prob mismatch (small)"
    assert jnp.allclose(jnp.sum(probs, axis=-1), 1.0, atol=1e-5)

    # --- larger batch: tiled, batch-parallel path (grid of 2 blocks) ------------
    s_big = jax.random.normal(k_s_big, (1024, IN_DIM), jnp.float32)
    logp_b, probs_b = manager_forward(s_big, params)
    jax.block_until_ready((logp_b, probs_b))

    ref_logp_b, ref_probs_b = _reference(s_big, params)
    assert logp_b.shape == (1024, N_SKILLS)
    assert jnp.allclose(logp_b, ref_logp_b, atol=1e-5), "log-prob mismatch (big)"
    assert jnp.allclose(probs_b, ref_probs_b, atol=1e-5), "prob mismatch (big)"
    assert jnp.allclose(jnp.sum(probs_b, axis=-1), 1.0, atol=1e-5)

    print("KERNEL_OK")
</pallas_src>

<mosaic_0001>
module attributes {stable_mosaic.version = 11 : i64} {
  func.func @manager_kernel(%arg0: memref<2x8xf32, #tpu.memory_space<vmem>>, %arg1: memref<32x2xf32, #tpu.memory_space<vmem>>, %arg2: memref<32x1xf32, #tpu.memory_space<vmem>>, %arg3: memref<32x32xf32, #tpu.memory_space<vmem>>, %arg4: memref<32x1xf32, #tpu.memory_space<vmem>>, %arg5: memref<8x32xf32, #tpu.memory_space<vmem>>, %arg6: memref<8x1xf32, #tpu.memory_space<vmem>>, %arg7: memref<8x8xf32, #tpu.memory_space<vmem>>, %arg8: memref<8x8xf32, #tpu.memory_space<vmem>>) attributes {dimension_semantics = [], scalar_prefetch = 0 : i64, scratch_operands = 0 : i64, tpu.core_type = #tpu.core_type<tc>} {
    %c0 = arith.constant 0 : index
    %c0_0 = arith.constant 0 : index
    %0 = vector.load %arg0[%c0, %c0_0] : memref<2x8xf32, #tpu.memory_space<vmem>>, vector<2x8xf32>
    %c0_1 = arith.constant 0 : index
    %c0_2 = arith.constant 0 : index
    %1 = vector.load %arg1[%c0_1, %c0_2] : memref<32x2xf32, #tpu.memory_space<vmem>>, vector<32x2xf32>
    %2 = vector.extract_strided_slice %1 {offsets = [0, 0], sizes = [32, 1], strides = [1, 1]} : vector<32x2xf32> to vector<32x1xf32>
    %3 = vector.extract_strided_slice %0 {offsets = [0, 0], sizes = [1, 8], strides = [1, 1]} : vector<2x8xf32> to vector<1x8xf32>
    %4 = vector.broadcast %2 : vector<32x1xf32> to vector<32x8xf32>
    %5 = vector.broadcast %3 : vector<1x8xf32> to vector<32x8xf32>
    %6 = arith.mulf %4, %5 : vector<32x8xf32>
    %7 = vector.extract_strided_slice %1 {offsets = [0, 1], sizes = [32, 1], strides = [1, 1]} : vector<32x2xf32> to vector<32x1xf32>
    %8 = vector.extract_strided_slice %0 {offsets = [1, 0], sizes = [1, 8], strides = [1, 1]} : vector<2x8xf32> to vector<1x8xf32>
    %9 = vector.broadcast %7 : vector<32x1xf32> to vector<32x8xf32>
    %10 = vector.broadcast %8 : vector<1x8xf32> to vector<32x8xf32>
    %11 = arith.mulf %9, %10 : vector<32x8xf32>
    %12 = arith.addf %6, %11 : vector<32x8xf32>
    %c0_3 = arith.constant 0 : index
    %c0_4 = arith.constant 0 : index
    %13 = vector.load %arg2[%c0_3, %c0_4] : memref<32x1xf32, #tpu.memory_space<vmem>>, vector<32x1xf32>
    %14 = vector.broadcast %13 : vector<32x1xf32> to vector<32x8xf32>
    %15 = arith.addf %12, %14 : vector<32x8xf32>
    %cst = arith.constant 0.000000e+00 : f32
    %16 = vector.broadcast %cst : f32 to vector<32x8xf32>
    %17 = arith.maximumf %15, %16 : vector<32x8xf32>
    %c0_5 = arith.constant 0 : index
    %c0_6 = arith.constant 0 : index
    %18 = vector.load %arg3[%c0_5, %c0_6] : memref<32x32xf32, #tpu.memory_space<vmem>>, vector<32x32xf32>
    %cst_7 = arith.constant dense<0.000000e+00> : vector<32x8xf32>
    %19 = tpu.matmul %18, %17, %cst_7 {dimension_numbers = #tpu.dot_dimension_numbers<[1], [0], [0], [1], [0, 0, 1, 1], [], []>} : vector<32x32xf32>, vector<32x8xf32>, vector<32x8xf32> -> vector<32x8xf32>
    %c0_8 = arith.constant 0 : index
    %c0_9 = arith.constant 0 : index
    %20 = vector.load %arg4[%c0_8, %c0_9] : memref<32x1xf32, #tpu.memory_space<vmem>>, vector<32x1xf32>
    %21 = vector.broadcast %20 : vector<32x1xf32> to vector<32x8xf32>
    %22 = arith.addf %19, %21 : vector<32x8xf32>
    %cst_10 = arith.constant 0.000000e+00 : f32
    %23 = vector.broadcast %cst_10 : f32 to vector<32x8xf32>
    %24 = arith.maximumf %22, %23 : vector<32x8xf32>
    %c0_11 = arith.constant 0 : index
    %c0_12 = arith.constant 0 : index
    %25 = vector.load %arg5[%c0_11, %c0_12] : memref<8x32xf32, #tpu.memory_space<vmem>>, vector<8x32xf32>
    %cst_13 = arith.constant dense<0.000000e+00> : vector<8x8xf32>
    %26 = tpu.matmul %25, %24, %cst_13 {dimension_numbers = #tpu.dot_dimension_numbers<[1], [0], [0], [1], [0, 0, 1, 1], [], []>} : vector<8x32xf32>, vector<32x8xf32>, vector<8x8xf32> -> vector<8x8xf32>
    %c0_14 = arith.constant 0 : index
    %c0_15 = arith.constant 0 : index
    %27 = vector.load %arg6[%c0_14, %c0_15] : memref<8x1xf32, #tpu.memory_space<vmem>>, vector<8x1xf32>
    %28 = vector.broadcast %27 : vector<8x1xf32> to vector<8x8xf32>
    %29 = arith.addf %26, %28 : vector<8x8xf32>
    %cst_16 = arith.constant dense<0xFF800000> : vector<8xf32>
    %30 = vector.multi_reduction <maximumf>, %29, %cst_16 [0] : vector<8x8xf32> to vector<8xf32>
    %31 = vector.shape_cast %30 : vector<8xf32> to vector<1x8xf32>
    %32 = vector.broadcast %31 : vector<1x8xf32> to vector<8x8xf32>
    %33 = arith.subf %29, %32 : vector<8x8xf32>
    %34 = math.exp %33 : vector<8x8xf32>
    %cst_17 = arith.constant dense<0.000000e+00> : vector<8xf32>
    %35 = vector.multi_reduction <add>, %34, %cst_17 [0] : vector<8x8xf32> to vector<8xf32>
    %36 = vector.shape_cast %35 : vector<8xf32> to vector<1x8xf32>
    %37 = math.log %36 : vector<1x8xf32>
    %38 = vector.broadcast %37 : vector<1x8xf32> to vector<8x8xf32>
    %39 = arith.subf %33, %38 : vector<8x8xf32>
    %c0_18 = arith.constant 0 : index
    %c0_19 = arith.constant 0 : index
    %40 = vector.load %arg7[%c0_18, %c0_19] : memref<8x8xf32, #tpu.memory_space<vmem>>, vector<8x8xf32>
    tpu.vector_store %arg7[%c0_18, %c0_19], %39 {strides = array<i32>} : memref<8x8xf32, #tpu.memory_space<vmem>>, vector<8x8xf32>,
    %41 = math.exp %39 : vector<8x8xf32>
    %c0_20 = arith.constant 0 : index
    %c0_21 = arith.constant 0 : index
    %42 = vector.load %arg8[%c0_20, %c0_21] : memref<8x8xf32, #tpu.memory_space<vmem>>, vector<8x8xf32>
    tpu.vector_store %arg8[%c0_20, %c0_21], %41 {strides = array<i32>} : memref<8x8xf32, #tpu.memory_space<vmem>>, vector<8x8xf32>,
    return
  }
}

</mosaic_0001>

<llo_original>
// kernel: tpu_custom_call.1
$region0: #{tpu_custom_call.1}
  #allocation0 [shape = 'u32[]', space=smem, size = 0x4, offset = 0x4, fixed_abs, tag = 'smem constant byte address 0x4 - core index']
  #allocation1 [shape = 'u32[144,128]{1,0:T(1,128)}', space=vmem, size = 0x12000, scoped, tag = 'internal scratch']
  %s0 = inlined_call_operand.vmem [shape: f32[2,8], index: 0, kind: input, shape index: {}]
  %s1 = inlined_call_operand.vmem [shape: f32[32,2], index: 1, kind: input, shape index: {}]
  %s2 = inlined_call_operand.vmem [shape: f32[32,1], index: 2, kind: input, shape index: {}]
  %s3 = inlined_call_operand.vmem [shape: f32[32,32], index: 3, kind: input, shape index: {}]
  %s4 = inlined_call_operand.vmem [shape: f32[32,1], index: 4, kind: input, shape index: {}]
  %s5 = inlined_call_operand.vmem [shape: f32[8,32], index: 5, kind: input, shape index: {}]
  %s6 = inlined_call_operand.vmem [shape: f32[8,1], index: 6, kind: input, shape index: {}]
  %s7 = inlined_call_operand.hbm [shape: f32[8,8], index: 7, kind: output, shape index: {0}]
  %s8 = inlined_call_operand.hbm [shape: f32[8,8], index: 8, kind: output, shape index: {1}]
  %9 = xla_tuple %s7, %s8
  %s10 = sld [smem:[#allocation0]]
  $region46: #{tpu_custom_call.1} parent=0
    _
  %s12 = ssub.s32 1, %s10
  %s13 = scalar_select 0, %s12, %s10
  $region1: #{tpu_custom_call.1} parent=0
    #allocation2 [shape = 'u8[4096]{0}', space=vmem, size = 0x1000, scoped, tag = 'output window, operand 0, single buffered']
    #allocation3 [shape = 's32[1]{0}', space=sflag, size = 0x4, scoped, tag = 'scoped memory for tpu_custom_call.1']
    #allocation4 [shape = 'u8[4096]{0}', space=vmem, size = 0x1000, scoped, tag = 'output window, operand 1, single buffered']
    #allocation5 [shape = 's32[1]{0}', space=sflag, size = 0x4, scoped, tag = 'scoped memory for tpu_custom_call.1']
    %14 = vsyncpa [#allocation3], 0
    %15 = vsyncpa [#allocation5], 0
    // Predicated region
    $region2: #{tpu_custom_call.1} parent=1 // pred_check
      _
    $region3: #{tpu_custom_call.1} parent=1 // pred_check_branch
      %17 = sbr.rel (0) target = $region5
    $region4: #{tpu_custom_call.1} parent=1 // pred_region
      _
    $region5: #{tpu_custom_call.1} parent=1 // pred_fallthru
      _
    // Predicated region
    $region6: #{tpu_custom_call.1} parent=1 // pred_check
      _
    $region7: #{tpu_custom_call.1} parent=1 // pred_check_branch
      %19 = sbr.rel (0) target = $region9
    $region8: #{tpu_custom_call.1} parent=1 // pred_region
      _
    $region9: #{tpu_custom_call.1} parent=1 // pred_fallthru
      _
    // Predicated region
    $region10: #{tpu_custom_call.1} parent=1 // pred_check
      _
    $region11: #{tpu_custom_call.1} parent=1 // pred_check_branch
      %21 = sbr.rel (0) target = $region13
    $region12: #{tpu_custom_call.1} parent=1 // pred_region
      _
    $region13: #{tpu_custom_call.1} parent=1 // pred_fallthru
      _
    // Predicated region
    $region14: #{tpu_custom_call.1} parent=1 // pred_check
      _
    $region15: #{tpu_custom_call.1} parent=1 // pred_check_branch
      %23 = sbr.rel (0) target = $region17
    $region16: #{tpu_custom_call.1} parent=1 // pred_region
      _
    $region17: #{tpu_custom_call.1} parent=1 // pred_fallthru
      _
    // Predicated region
    $region18: #{tpu_custom_call.1} parent=1 // pred_check
      _
    $region19: #{tpu_custom_call.1} parent=1 // pred_check_branch
      %25 = sbr.rel (0) target = $region21
    $region20: #{tpu_custom_call.1} parent=1 // pred_region
      _
    $region21: #{tpu_custom_call.1} parent=1 // pred_fallthru
      _
    // Predicated region
    $region22: #{tpu_custom_call.1} parent=1 // pred_check
      _
    $region23: #{tpu_custom_call.1} parent=1 // pred_check_branch
      %27 = sbr.rel (0) target = $region25
    $region24: #{tpu_custom_call.1} parent=1 // pred_region
      _
    $region25: #{tpu_custom_call.1} parent=1 // pred_fallthru
      _
    // Predicated region
    $region26: #{tpu_custom_call.1} parent=1 // pred_check
      _
    $region27: #{tpu_custom_call.1} parent=1 // pred_check_branch
      %29 = sbr.rel (0) target = $region29
    $region28: #{tpu_custom_call.1} parent=1 // pred_region
      _
    $region29: #{tpu_custom_call.1} parent=1 // pred_fallthru
      _
    %v30 = vld [vmem:[%s0] sm:$0x3]
    %v31 = vld [vmem:[%s1] sm:$0xff]
    %v32 = vld [vmem:[%s1 + $0x8] sm:$0xff]
    %v33 = vld [vmem:[%s1 + $0x10] sm:$0xff]
    %v34 = vld [vmem:[%s1 + $0x18] sm:$0xff]
    %36 = vset.pattern.permute.xlu0 0
    %37 = vperm.xlu0 %36, %v31
    %v38 = vpop.permute.xlu0 %37
    %41 = vset.pattern.permute.xlu0 0
    %42 = vperm.xlu0 %41, %v32
    %v43 = vpop.permute.xlu0 %42
    %46 = vset.pattern.permute.xlu0 0
    %47 = vperm.xlu0 %46, %v33
    %v48 = vpop.permute.xlu0 %47
    %51 = vset.pattern.permute.xlu0 0
    %52 = vperm.xlu0 %51, %v34
    %v53 = vpop.permute.xlu0 %52
    %v55 = vlaneseq
    %v56 = vshrl.u32 %v55, 7
    %v57 = vsub.s32 0, %v56
    %v58 = vrot.slane %v30, %v57
    %v59 = vmul.f32 %v38, %v58
    %v60 = vmul.f32 %v43, %v58
    %v61 = vmul.f32 %v48, %v58
    %v62 = vmul.f32 %v53, %v58
    %63 = vset.pattern.permute.xlu0 1
    %64 = vperm.xlu0 %63, %v31
    %v65 = vpop.permute.xlu0 %64
    %67 = vset.pattern.permute.xlu0 1
    %68 = vperm.xlu0 %67, %v32
    %v69 = vpop.permute.xlu0 %68
    %71 = vset.pattern.permute.xlu0 1
    %72 = vperm.xlu0 %71, %v33
    %v73 = vpop.permute.xlu0 %72
    %75 = vset.pattern.permute.xlu0 1
    %76 = vperm.xlu0 %75, %v34
    %v77 = vpop.permute.xlu0 %76
    %v79 = vlaneseq
    %v80 = vshrl.u32 %v79, 7
    %v81 = vsub.s32 1, %v80
    %v82 = vrot.slane %v30, %v81
    %v83 = vmul.f32 %v65, %v82
    %v84 = vmul.f32 %v69, %v82
    %v85 = vmul.f32 %v73, %v82
    %v86 = vmul.f32 %v77, %v82
    %v87 = vadd.f32 %v59, %v83
    %v88 = vadd.f32 %v60, %v84
    %v89 = vadd.f32 %v61, %v85
    %v90 = vadd.f32 %v62, %v86
    %v91 = vld [vmem:[%s2] sm:$0xff]
    %v92 = vld [vmem:[%s2 + $0x8] sm:$0xff]
    %v93 = vld [vmem:[%s2 + $0x10] sm:$0xff]
    %v94 = vld [vmem:[%s2 + $0x18] sm:$0xff]
    %96 = vset.pattern.permute.xlu0 0
    %97 = vperm.xlu0 %96, %v91
    %v98 = vpop.permute.xlu0 %97
    %101 = vset.pattern.permute.xlu0 0
    %102 = vperm.xlu0 %101, %v92
    %v103 = vpop.permute.xlu0 %102
    %106 = vset.pattern.permute.xlu0 0
    %107 = vperm.xlu0 %106, %v93
    %v108 = vpop.permute.xlu0 %107
    %111 = vset.pattern.permute.xlu0 0
    %112 = vperm.xlu0 %111, %v94
    %v113 = vpop.permute.xlu0 %112
    %v115 = vadd.f32 %v87, %v98
    %v116 = vadd.f32 %v88, %v103
    %v117 = vadd.f32 %v89, %v108
    %v118 = vadd.f32 %v90, %v113
    %v119 = vmax.f32 %v115, 0.0
    %v120 = vmax.f32 %v116, 0.0
    %v121 = vmax.f32 %v117, 0.0
    %v122 = vmax.f32 %v118, 0.0
    %v123 = vld [vmem:[%s3] sm:$0xff]
    %v124 = vld [vmem:[%s3 + $0x8] sm:$0xff]
    %v125 = vld [vmem:[%s3 + $0x10] sm:$0xff]
    %v126 = vld [vmem:[%s3 + $0x18] sm:$0xff]
    %v127 = vld [vmem:[%s4] sm:$0xff]
    %v128 = vld [vmem:[%s4 + $0x8] sm:$0xff]
    %v129 = vld [vmem:[%s4 + $0x10] sm:$0xff]
    %v130 = vld [vmem:[%s4 + $0x18] sm:$0xff]
    %132 = vset.pattern.permute.xlu0 0
    %133 = vperm.xlu0 %132, %v127
    %v134 = vpop.permute.xlu0 %133
    %137 = vset.pattern.permute.xlu0 0
    %138 = vperm.xlu0 %137, %v128
    %v139 = vpop.permute.xlu0 %138
    %142 = vset.pattern.permute.xlu0 0
    %143 = vperm.xlu0 %142, %v129
    %v144 = vpop.permute.xlu0 %143
    %147 = vset.pattern.permute.xlu0 0
    %148 = vperm.xlu0 %147, %v130
    %v149 = vpop.permute.xlu0 %148
    %vm151 = vcmask 261120
    %v153 = vsel %vm151, %v123, 0
    %v156 = vsel %vm151, %v124, 0
    %v159 = vsel %vm151, %v125, 0
    %v162 = vsel %vm151, %v126, 0
    %164 = vmatprep.subr.mxu0 0.0
    %165 = vmatpush1.msra.mxu0 %v119
    %166 = vmatprep.subr.mxu0 0.0
    %167 = vmatpush1.msra.mxu0 %v120
    %168 = vmatprep.subr.mxu0 0.0
    %169 = vmatpush1.msra.mxu0 %v121
    %170 = vmatprep.subr.mxu0 0.0
    %171 = vmatpush1.msra.mxu0 %v122
    %172 = vmatprep.subr.mxu0 0.0
    %173 = vmatpush1.msra.mxu0 0.0
    %174 = vmatprep.subr.mxu0 0.0
    %175 = vmatpush1.msra.mxu0 0.0
    %176 = vmatprep.subr.mxu0 0.0
    %177 = vmatpush1.msra.mxu0 0.0
    %178 = vmatprep.subr.mxu0 0.0
    %179 = vmatpush1.msra.mxu0 0.0
    %180 = vmatprep.subr.mxu0 0.0
    %181 = vmatpush1.msra.mxu0 0.0
    %182 = vmatprep.subr.mxu0 0.0
    %183 = vmatpush1.msra.mxu0 0.0
    %184 = vmatprep.subr.mxu0 0.0
    %185 = vmatpush1.msra.mxu0 0.0
    %186 = vmatprep.subr.mxu0 0.0
    %187 = vmatpush1.msra.mxu0 0.0
    %188 = vmatprep.subr.mxu0 0.0
    %189 = vmatpush1.msra.mxu0 0.0
    %190 = vmatprep.subr.mxu0 0.0
    %191 = vmatpush1.msra.mxu0 0.0
    %192 = vmatprep.subr.mxu0 0.0
    %193 = vmatpush1.msra.mxu0 0.0
    %194 = vmatprep.subr.mxu0 0.0
    %195 = vmatpush1.msra.mxu0 0.0
    %196 = vmatprep.subr.mxu0 0.0
    %197 = vmatpush1.msra.mxu0 0.0
    %198 = vmatprep.subr.mxu0 0.0
    %199 = vmatpush1.msra.mxu0 0.0
    %200 = vmatprep.subr.mxu0 0.0
    %201 = vmatpush1.msra.mxu0 0.0
    %202 = vmatprep.subr.mxu0 0.0
    %203 = vmatpush1.msra.mxu0 0.0
    %204 = vmatprep.subr.mxu0 0.0
    %205 = vmatpush1.msra.mxu0 0.0
    %206 = vmatprep.subr.mxu0 0.0
    %207 = vmatpush1.msra.mxu0 0.0
    %208 = vmatprep.subr.mxu0 0.0
    %209 = vmatpush1.msra.mxu0 0.0
    %210 = vmatprep.subr.mxu0 0.0
    %211 = vmatpush1.msra.mxu0 0.0
    %212 = vmatprep.subr.mxu0 0.0
    %213 = vmatpush1.msra.mxu0 0.0
    %214 = vmatprep.subr.mxu0 0.0
    %215 = vmatpush1.msra.mxu0 0.0
    %216 = vmatprep.subr.mxu0 0.0
    %217 = vmatpush1.msra.mxu0 0.0
    %218 = vmatprep.subr.mxu0 0.0
    %219 = vmatpush1.msra.mxu0 0.0
    %220 = vmatprep.subr.mxu0 0.0
    %221 = vmatpush1.msra.mxu0 0.0
    %222 = vmatprep.subr.mxu0 0.0
    %223 = vmatpush1.msra.mxu0 0.0
    %224 = vmatprep.subr.mxu0 0.0
    %225 = vmatpush1.msra.mxu0 0.0
    %226 = vmatprep.subr.mxu0 0.0
    %227 = vmatpush1.msra.mxu0 0.0
    %228 = vmatprep.mubr.f32.mxu0 0.0
    %229 = vmatmul.mubr.f32.gmra.mrb[0].mxu0 %v153
    %v230 = vpop.f32.mrb[0].mxu0
    %v231 = vadd.f32 %v134, %v230
    %v232 = vpop.f32.mrb[0].mxu0
    %233 = vmatprep.mubr.f32.mxu0 0.0
    %234 = vmatmul.mubr.f32.gmra.mrb[0].mxu0 %v156
    %v235 = vpop.f32.mrb[0].mxu0
    %v236 = vadd.f32 %v139, %v235
    %v237 = vpop.f32.mrb[0].mxu0
    %238 = vmatprep.mubr.f32.mxu0 0.0
    %239 = vmatmul.mubr.f32.gmra.mrb[0].mxu0 %v159
    %v240 = vpop.f32.mrb[0].mxu0
    %v241 = vadd.f32 %v144, %v240
    %v242 = vpop.f32.mrb[0].mxu0
    %243 = vmatprep.mubr.f32.mxu0 0.0
    %244 = vmatmul.mubr.f32.gmra.mrb[0].mxu0 %v162
    %v245 = vpop.f32.mrb[0].mxu0
    %v246 = vadd.f32 %v149, %v245
    %v247 = vpop.f32.mrb[0].mxu0
    %248 = vdwg.mxu0
    %v249 = vmax.f32 %v231, 0.0
    %v250 = vmax.f32 %v236, 0.0
    %v251 = vmax.f32 %v241, 0.0
    %v252 = vmax.f32 %v246, 0.0
    %v253 = vld [vmem:[%s5] sm:$0xff]
    %v254 = vld [vmem:[%s6] sm:$0xff]
    %256 = vset.pattern.permute.xlu0 0
    %257 = vperm.xlu0 %256, %v254
    %v258 = vpop.permute.xlu0 %257
    %v261 = vsel %vm151, %v253, 0
    %263 = vmatprep.subr.mxu0 0.0
    %264 = vmatpush1.msra.mxu0 %v249
    %265 = vmatprep.subr.mxu0 0.0
    %266 = vmatpush1.msra.mxu0 %v250
    %267 = vmatprep.subr.mxu0 0.0
    %268 = vmatpush1.msra.mxu0 %v251
    %269 = vmatprep.subr.mxu0 0.0
    %270 = vmatpush1.msra.mxu0 %v252
    %271 = vmatprep.subr.mxu0 0.0
    %272 = vmatpush1.msra.mxu0 0.0
    %273 = vmatprep.subr.mxu0 0.0
    %274 = vmatpush1.msra.mxu0 0.0
    %275 = vmatprep.subr.mxu0 0.0
    %276 = vmatpush1.msra.mxu0 0.0
    %277 = vmatprep.subr.mxu0 0.0
    %278 = vmatpush1.msra.mxu0 0.0
    %279 = vmatprep.subr.mxu0 0.0
    %280 = vmatpush1.msra.mxu0 0.0
    %281 = vmatprep.subr.mxu0 0.0
    %282 = vmatpush1.msra.mxu0 0.0
    %283 = vmatprep.subr.mxu0 0.0
    %284 = vmatpush1.msra.mxu0 0.0
    %285 = vmatprep.subr.mxu0 0.0
    %286 = vmatpush1.msra.mxu0 0.0
    %287 = vmatprep.subr.mxu0 0.0
    %288 = vmatpush1.msra.mxu0 0.0
    %289 = vmatprep.subr.mxu0 0.0
    %290 = vmatpush1.msra.mxu0 0.0
    %291 = vmatprep.subr.mxu0 0.0
    %292 = vmatpush1.msra.mxu0 0.0
    %293 = vmatprep.subr.mxu0 0.0
    %294 = vmatpush1.msra.mxu0 0.0
    %295 = vmatprep.subr.mxu0 0.0
    %296 = vmatpush1.msra.mxu0 0.0
    %297 = vmatprep.subr.mxu0 0.0
    %298 = vmatpush1.msra.mxu0 0.0
    %299 = vmatprep.subr.mxu0 0.0
    %300 = vmatpush1.msra.mxu0 0.0
    %301 = vmatprep.subr.mxu0 0.0
    %302 = vmatpush1.msra.mxu0 0.0
    %303 = vmatprep.subr.mxu0 0.0
    %304 = vmatpush1.msra.mxu0 0.0
    %305 = vmatprep.subr.mxu0 0.0
    %306 = vmatpush1.msra.mxu0 0.0
    %307 = vmatprep.subr.mxu0 0.0
    %308 = vmatpush1.msra.mxu0 0.0
    %309 = vmatprep.subr.mxu0 0.0
    %310 = vmatpush1.msra.mxu0 0.0
    %311 = vmatprep.subr.mxu0 0.0
    %312 = vmatpush1.msra.mxu0 0.0
    %313 = vmatprep.subr.mxu0 0.0
    %314 = vmatpush1.msra.mxu0 0.0
    %315 = vmatprep.subr.mxu0 0.0
    %316 = vmatpush1.msra.mxu0 0.0
    %317 = vmatprep.subr.mxu0 0.0
    %318 = vmatpush1.msra.mxu0 0.0
    %319 = vmatprep.subr.mxu0 0.0
    %320 = vmatpush1.msra.mxu0 0.0
    %321 = vmatprep.subr.mxu0 0.0
    %322 = vmatpush1.msra.mxu0 0.0
    %323 = vmatprep.subr.mxu0 0.0
    %324 = vmatpush1.msra.mxu0 0.0
    %325 = vmatprep.subr.mxu0 0.0
    %326 = vmatpush1.msra.mxu0 0.0
    %327 = vmatprep.mubr.f32.mxu0 0.0
    %328 = vmatmul.mubr.f32.gmra.mrb[0].mxu0 %v261
    %v329 = vpop.f32.mrb[0].mxu0
    %v330 = vadd.f32 %v258, %v329
    %v331 = vpop.f32.mrb[0].mxu0
    %332 = vdwg.mxu0
    %vm333 = vcmask 64512
    %v334 = vsel %vm333, %v330, -inf
    %v335 = vrot.slane %v334, 4
    %v336 = vmax.f32 %v334, %v335
    %v337 = vrot.slane %v336, 2
    %v338 = vmax.f32 %v336, %v337
    %v339 = vrot.slane %v338, 1
    %v340 = vmax.f32 %v338, %v339
    %v341 = vsub.f32 %v330, %v340
    %v342 = vmul.f32 %v341, 1.442695
    %v343 = vpow.pop %v342
    %v344 = vsel %vm333, %v343, 0.0
    %v345 = vrot.slane %v344, 4
    %v346 = vadd.f32 %v344, %v345
    %v347 = vrot.slane %v346, 2
    %v348 = vadd.f32 %v346, %v347
    %v349 = vrot.slane %v348, 1
    %v350 = vadd.f32 %v348, %v349
    %v351 = vlog2.pop %v350
    %v352 = vmul.f32 %v351, 0.6931472
    %v353 = vsub.f32 %v341, %v352
    %354 = vst.msk [vmem:[#allocation2] sm:$0xff] %vm333, %v353
    %v355 = vmul.f32 %v353, 1.442695
    %v356 = vpow.pop %v355
    %357 = vst.msk [vmem:[#allocation4] sm:$0xff] %vm333, %v356
    // Predicated region
    $region30: #{tpu_custom_call.1} parent=1 // pred_check
      _
    $region31: #{tpu_custom_call.1} parent=1 // pred_check_branch
      %359 = sbr.rel (0) target = $region33
    $region32: #{tpu_custom_call.1} parent=1 // pred_region
      %s361 = ssub.s32 128, 128
      %362 = vsyncadd [#allocation3], %s361
      %s364 = sshll.u32 [#allocation2], 4
      %s365 = int_to_ptr.vmem [resolvable:$true] %s364
      %367 = dma.vmem_to_hbm [thread:$0]  %s365, 128, %s7, [#allocation3]
    $region33: #{tpu_custom_call.1} parent=1 // pred_fallthru
      _
    // Predicated region
    $region34: #{tpu_custom_call.1} parent=1 // pred_check
      _
    $region35: #{tpu_custom_call.1} parent=1 // pred_check_branch
      %369 = sbr.rel (0) target = $region37
    $region36: #{tpu_custom_call.1} parent=1 // pred_region
      %s371 = ssub.s32 128, 128
      %372 = vsyncadd [#allocation5], %s371
      %s374 = sshll.u32 [#allocation4], 4
      %s375 = int_to_ptr.vmem [resolvable:$true] %s374
      %377 = dma.vmem_to_hbm [thread:$0]  %s375, 128, %s8, [#allocation5]
    $region37: #{tpu_custom_call.1} parent=1 // pred_fallthru
      _
    // Predicated region
    $region38: #{tpu_custom_call.1} parent=1 // pred_check
      _
    $region39: #{tpu_custom_call.1} parent=1 // pred_check_branch
      %379 = sbr.rel (0) target = $region41
    $region40: #{tpu_custom_call.1} parent=1 // pred_region
      %380 = dma.done [#allocation3], 128
    $region41: #{tpu_custom_call.1} parent=1 // pred_fallthru
      _
    // Predicated region
    $region42: #{tpu_custom_call.1} parent=1 // pred_check
      _
    $region43: #{tpu_custom_call.1} parent=1 // pred_check_branch
      %382 = sbr.rel (0) target = $region45
    $region44: #{tpu_custom_call.1} parent=1 // pred_region
      %383 = dma.done [#allocation5], 128
    $region45: #{tpu_custom_call.1} parent=1 // pred_fallthru
      _
    %384 = vsyncpa [#allocation3], 1
    %385 = vsyncpa [#allocation5], 1

</llo_original>
